<compile_context>
chip_gen: v7x
topology: tpu7x:2x2x1
jax: 0.10.0
libtpu: 0.0.40
codegen_flags: <defaults>
</compile_context>

<pallas_src>
import jax
import jax.numpy as jnp
from jax import lax
from jax.experimental import pallas as pl
from jax.experimental.pallas import tpu as pltpu


_LANE = 128


def _round_up(x, m):
    return ((x + m - 1) // m) * m


def _margin_ranking_kernel(margin, n_valid, block_m, block_n):
    def kernel(im_ref, s_ref, inv_im_ref, inv_s_ref, d1_ref, d2_ref,
               out_ref, acc_ref):
        i = pl.program_id(0)
        j = pl.program_id(1)

        @pl.when(j == 0)
        def _init():
            acc_ref[...] = jnp.zeros_like(acc_ref)

        # Raw (unnormalized) blocks straight to the MXU; normalization is folded
        # into a post-matmul broadcast scaling of the f32 scores tile.
        raw = lax.dot_general(
            im_ref[...], s_ref[...],
            dimension_numbers=(((1,), (1,)), ((), ())),
            preferred_element_type=jnp.float32,
        )
        scores = raw * inv_im_ref[...] * inv_s_ref[...]   # (bm,1) and (1,bn) bcast

        cost_s = jnp.maximum(margin + scores - d1_ref[...], 0.0)   # i2t hinge
        cost_im = jnp.maximum(margin + scores - d2_ref[...], 0.0)  # t2i hinge
        contrib = cost_s + cost_im

        row0 = i * block_m
        col0 = j * block_n
        # The global diagonal crosses this tile iff its row/col ranges overlap.
        diag_hits = (row0 < col0 + block_n) & (col0 < row0 + block_m)
        # Pad rows/cols only live in the trailing tiles.
        has_pad = (row0 + block_m > n_valid) | (col0 + block_n > n_valid)
        needs_mask = diag_hits | has_pad

        @pl.when(needs_mask)
        def _masked_accum():
            rg = row0 + lax.broadcasted_iota(jnp.int32, (block_m, block_n), 0)
            cg = col0 + lax.broadcasted_iota(jnp.int32, (block_m, block_n), 1)
            keep = (rg != cg) & (rg < n_valid) & (cg < n_valid)
            acc_ref[...] += jnp.where(keep, contrib, 0.0)

        @pl.when(jnp.logical_not(needs_mask))
        def _plain_accum():
            acc_ref[...] += contrib

        @pl.when(j == pl.num_programs(1) - 1)
        def _finalize():
            out_ref[...] = jnp.sum(acc_ref[...], axis=1, keepdims=True)

    return kernel


def margin_ranking_loss(s, im, margin=0.0):
    """Pallas implementation of MarginRankingLoss(margin, 'cosine',
    max_violation=False, cost_style='sum', direction='bidir').forward(s, im)."""
    assert s.ndim == 2 and s.shape == im.shape
    N, D = s.shape

    # --- O(N*D) prologue: per-row inverse L2 norms + cosine diagonal (tiny). ---
    sf = s.astype(jnp.float32)
    imf = im.astype(jnp.float32)
    inv_s = lax.rsqrt(jnp.sum(sf * sf, axis=1, keepdims=True))        # (N, 1)
    inv_im = lax.rsqrt(jnp.sum(imf * imf, axis=1, keepdims=True))     # (N, 1)
    diag = jnp.sum(imf * sf, axis=1, keepdims=True) * inv_im * inv_s  # (N, 1)

    # --- Block / padding selection: lane-dim blocks are multiples of 128. ---
    if N <= 256:
        block_n = _round_up(N, _LANE)
        block_m = block_n
        n_pad = block_n
    else:
        block_n = 256
        block_m = 512
        n_pad = _round_up(N, block_m)
    d_pad = _round_up(D, _LANE)

    itemsize = s.dtype.itemsize

    def _vmem_est(bm, bn):
        return (2 * (bm + bn) * d_pad * itemsize   # double-buffered im / s blocks
                + 2 * 2 * (bm + bn) * 4            # inv-norm / diagonal side inputs
                + bm * bn * 4                      # accumulator scratch
                + 2 * bm * 4)                      # output block

    # Leave pipeline headroom on v7x (64 MiB physical VMEM).
    while _vmem_est(block_m, block_n) > (40 << 20) and block_m > _LANE:
        block_m //= 2
    vmem_limit = int(min(100 << 20, max(32 << 20, 2 * _vmem_est(block_m, block_n))))

    def _pad2(x, rows, cols):
        pr, pc = rows - x.shape[0], cols - x.shape[1]
        if pr == 0 and pc == 0:
            return x
        return jnp.pad(x, ((0, pr), (0, pc)))

    im_p = _pad2(im, n_pad, d_pad)
    s_p = _pad2(s, n_pad, d_pad)
    inv_im_p = _pad2(inv_im, n_pad, 1)               # column vector, blocked on i
    d1_p = _pad2(diag, n_pad, 1)                     # column vector, blocked on i
    inv_s_p = _pad2(inv_s.reshape(1, N), 1, n_pad)   # row vector, blocked on j
    d2_p = _pad2(diag.reshape(1, N), 1, n_pad)       # row vector, blocked on j

    grid = (n_pad // block_m, n_pad // block_n)

    partial = pl.pallas_call(
        _margin_ranking_kernel(float(margin), N, block_m, block_n),
        out_shape=jax.ShapeDtypeStruct((n_pad, 1), jnp.float32),
        grid_spec=pltpu.PrefetchScalarGridSpec(
            num_scalar_prefetch=0,
            grid=grid,
            in_specs=[
                pl.BlockSpec((block_m, d_pad), lambda i, j: (i, 0)),  # im rows (resident over j)
                pl.BlockSpec((block_n, d_pad), lambda i, j: (j, 0)),  # s rows (streamed)
                pl.BlockSpec((block_m, 1), lambda i, j: (i, 0)),      # 1/||im_i||
                pl.BlockSpec((1, block_n), lambda i, j: (0, j)),      # 1/||s_j||
                pl.BlockSpec((block_m, 1), lambda i, j: (i, 0)),      # diag rows (d1)
                pl.BlockSpec((1, block_n), lambda i, j: (0, j)),      # diag cols (d2)
            ],
            out_specs=pl.BlockSpec((block_m, 1), lambda i, j: (i, 0)),
            scratch_shapes=[pltpu.VMEM((block_m, block_n), jnp.float32)],
        ),
        compiler_params=pltpu.CompilerParams(
            # i is independent across row blocks -> parallel (v7x megacore);
            # j carries the running accumulation -> arbitrary.
            dimension_semantics=("parallel", "arbitrary"),
            vmem_limit_bytes=vmem_limit,
        ),
    )(im_p, s_p, inv_im_p, inv_s_p, d1_p, d2_p)

    return jnp.sum(partial)


def _reference(s, im, margin=0.0):
    """Pure-JAX reference mirroring the PyTorch module."""
    sf = s.astype(jnp.float32)
    imf = im.astype(jnp.float32)

    def l2norm(x):
        return x / jnp.sqrt(jnp.sum(x * x, axis=1, keepdims=True))

    scores = l2norm(imf) @ l2norm(sf).T
    n = scores.shape[0]
    d = jnp.diag(scores).reshape(n, 1)
    eye = jnp.eye(n, dtype=bool)
    cost_s = jnp.where(eye, 0.0, jnp.maximum(margin + scores - d, 0.0))
    cost_im = jnp.where(eye, 0.0, jnp.maximum(margin + scores - d.T, 0.0))
    return jnp.sum(cost_s) + jnp.sum(cost_im)


if __name__ == "__main__":
    key = jax.random.PRNGKey(0)
    k1, k2, k3, k4, k5, k6 = jax.random.split(key, 6)

    # 1) Primary demo shape: batch of 8 (s, im) pairs, embedding dim 32.
    s1 = jax.random.normal(k1, (8, 32), dtype=jnp.float32)
    im1 = jax.random.normal(k2, (8, 32), dtype=jnp.float32)
    loss1 = jax.block_until_ready(margin_ranking_loss(s1, im1, margin=0.0))
    ref1 = _reference(s1, im1, margin=0.0)
    assert jnp.allclose(loss1, ref1, rtol=1e-4, atol=1e-4), (loss1, ref1)

    # 2) bf16 path + N/D padding + j-axis accumulation (N padded 300 -> 512).
    s2 = jax.random.normal(k3, (300, 96), dtype=jnp.float32).astype(jnp.bfloat16)
    im2 = jax.random.normal(k4, (300, 96), dtype=jnp.float32).astype(jnp.bfloat16)
    loss2 = jax.block_until_ready(margin_ranking_loss(s2, im2, margin=0.0))
    ref2 = _reference(s2, im2, margin=0.0)
    assert jnp.allclose(loss2, ref2, rtol=2e-2, atol=1.0), (loss2, ref2)

    # 3) Multi-row-block grid (parallel i axis), nonzero margin, diagonal/pad
    #    gating (N padded 1100 -> 1536, grid (3, 6)).
    s3 = jax.random.normal(k5, (1100, 160), dtype=jnp.float32)
    im3 = jax.random.normal(k6, (1100, 160), dtype=jnp.float32)
    loss3 = jax.block_until_ready(margin_ranking_loss(s3, im3, margin=0.2))
    ref3 = _reference(s3, im3, margin=0.2)
    assert jnp.allclose(loss3, ref3, rtol=1e-4, atol=1e-2), (loss3, ref3)

    print("KERNEL_OK")
</pallas_src>

<mosaic_0001>
module attributes {stable_mosaic.version = 11 : i64} {
  func.func @kernel(%arg0: i32, %arg1: i32, %arg2: memref<128x128xf32, #tpu.memory_space<vmem>>, %arg3: memref<128x128xf32, #tpu.memory_space<vmem>>, %arg4: memref<128x1xf32, #tpu.memory_space<vmem>>, %arg5: memref<1x128xf32, #tpu.memory_space<vmem>>, %arg6: memref<128x1xf32, #tpu.memory_space<vmem>>, %arg7: memref<1x128xf32, #tpu.memory_space<vmem>>, %arg8: memref<128x1xf32, #tpu.memory_space<vmem>>, %arg9: memref<128x128xf32, #tpu.memory_space<vmem>>) attributes {dimension_semantics = [#tpu.dimension_semantics<parallel>, #tpu.dimension_semantics<arbitrary>], iteration_bounds = array<i64: 1, 1>, scalar_prefetch = 0 : i64, scratch_operands = 1 : i64, tpu.core_type = #tpu.core_type<tc>, window_params = [{transform_indices = @transform_0, window_bounds = array<i64: 128, 128>}, {transform_indices = @transform_1, window_bounds = array<i64: 128, 128>}, {transform_indices = @transform_2, window_bounds = array<i64: 128, 1>}, {transform_indices = @transform_3, window_bounds = array<i64: 1, 128>}, {transform_indices = @transform_4, window_bounds = array<i64: 128, 1>}, {transform_indices = @transform_5, window_bounds = array<i64: 1, 128>}, {transform_indices = @transform_6, window_bounds = array<i64: 128, 1>}]} {
    %c0_i32 = arith.constant 0 : i32
    %0 = arith.cmpi eq, %arg1, %c0_i32 : i32
    %1 = arith.extui %0 : i1 to i32
    %c0_i32_0 = arith.constant 0 : i32
    %2 = arith.cmpi ne, %1, %c0_i32_0 : i32
    scf.if %2 {
      %cst_26 = arith.constant 0.000000e+00 : f32
      %48 = vector.broadcast %cst_26 : f32 to vector<128x128xf32>
      %c0_27 = arith.constant 0 : index
      %c0_28 = arith.constant 0 : index
      %49 = vector.load %arg9[%c0_27, %c0_28] : memref<128x128xf32, #tpu.memory_space<vmem>>, vector<128x128xf32>
      tpu.vector_store %arg9[%c0_27, %c0_28], %48 {strides = array<i32>} : memref<128x128xf32, #tpu.memory_space<vmem>>, vector<128x128xf32>,
    } else {
    }
    %c0 = arith.constant 0 : index
    %c0_1 = arith.constant 0 : index
    %3 = vector.load %arg2[%c0, %c0_1] : memref<128x128xf32, #tpu.memory_space<vmem>>, vector<128x128xf32>
    %c0_2 = arith.constant 0 : index
    %c0_3 = arith.constant 0 : index
    %4 = vector.load %arg3[%c0_2, %c0_3] : memref<128x128xf32, #tpu.memory_space<vmem>>, vector<128x128xf32>
    %cst = arith.constant dense<0.000000e+00> : vector<128x128xf32>
    %5 = tpu.matmul %3, %4, %cst {dimension_numbers = #tpu.dot_dimension_numbers<[1], [1], [0], [0], [0, 0, 1, 0], [], []>} : vector<128x128xf32>, vector<128x128xf32>, vector<128x128xf32> -> vector<128x128xf32>
    %c0_4 = arith.constant 0 : index
    %c0_5 = arith.constant 0 : index
    %6 = vector.load %arg4[%c0_4, %c0_5] : memref<128x1xf32, #tpu.memory_space<vmem>>, vector<128x1xf32>
    %7 = vector.broadcast %6 : vector<128x1xf32> to vector<128x128xf32>
    %8 = arith.mulf %5, %7 : vector<128x128xf32>
    %c0_6 = arith.constant 0 : index
    %c0_7 = arith.constant 0 : index
    %9 = vector.load %arg5[%c0_6, %c0_7] : memref<1x128xf32, #tpu.memory_space<vmem>>, vector<1x128xf32>
    %10 = vector.broadcast %9 : vector<1x128xf32> to vector<128x128xf32>
    %11 = arith.mulf %8, %10 : vector<128x128xf32>
    %cst_8 = arith.constant 0.000000e+00 : f32
    %12 = vector.broadcast %cst_8 : f32 to vector<128x128xf32>
    %13 = arith.addf %12, %11 : vector<128x128xf32>
    %c0_9 = arith.constant 0 : index
    %c0_10 = arith.constant 0 : index
    %14 = vector.load %arg6[%c0_9, %c0_10] : memref<128x1xf32, #tpu.memory_space<vmem>>, vector<128x1xf32>
    %15 = vector.broadcast %14 : vector<128x1xf32> to vector<128x128xf32>
    %16 = arith.subf %13, %15 : vector<128x128xf32>
    %cst_11 = arith.constant 0.000000e+00 : f32
    %17 = vector.broadcast %cst_11 : f32 to vector<128x128xf32>
    %18 = arith.maximumf %16, %17 : vector<128x128xf32>
    %cst_12 = arith.constant 0.000000e+00 : f32
    %19 = vector.broadcast %cst_12 : f32 to vector<128x128xf32>
    %20 = arith.addf %19, %11 : vector<128x128xf32>
    %c0_13 = arith.constant 0 : index
    %c0_14 = arith.constant 0 : index
    %21 = vector.load %arg7[%c0_13, %c0_14] : memref<1x128xf32, #tpu.memory_space<vmem>>, vector<1x128xf32>
    %22 = vector.broadcast %21 : vector<1x128xf32> to vector<128x128xf32>
    %23 = arith.subf %20, %22 : vector<128x128xf32>
    %cst_15 = arith.constant 0.000000e+00 : f32
    %24 = vector.broadcast %cst_15 : f32 to vector<128x128xf32>
    %25 = arith.maximumf %23, %24 : vector<128x128xf32>
    %26 = arith.addf %18, %25 : vector<128x128xf32>
    %c128_i32 = arith.constant 128 : i32
    %27 = arith.muli %arg0, %c128_i32 : i32
    %c128_i32_16 = arith.constant 128 : i32
    %28 = arith.muli %arg1, %c128_i32_16 : i32
    %c128_i32_17 = arith.constant 128 : i32
    %29 = arith.addi %28, %c128_i32_17 : i32
    %30 = arith.cmpi slt, %27, %29 : i32
    %c128_i32_18 = arith.constant 128 : i32
    %31 = arith.addi %27, %c128_i32_18 : i32
    %32 = arith.cmpi slt, %28, %31 : i32
    %33 = arith.andi %30, %32 : i1
    %c128_i32_19 = arith.constant 128 : i32
    %34 = arith.addi %27, %c128_i32_19 : i32
    %c8_i32 = arith.constant 8 : i32
    %35 = arith.cmpi sgt, %34, %c8_i32 : i32
    %c128_i32_20 = arith.constant 128 : i32
    %36 = arith.addi %28, %c128_i32_20 : i32
    %c8_i32_21 = arith.constant 8 : i32
    %37 = arith.cmpi sgt, %36, %c8_i32_21 : i32
    %38 = arith.ori %35, %37 : i1
    %39 = arith.ori %33, %38 : i1
    %40 = arith.extui %39 : i1 to i32
    %c0_i32_22 = arith.constant 0 : i32
    %41 = arith.cmpi ne, %40, %c0_i32_22 : i32
    scf.if %41 {
      %48 = tpu.iota {dimensions = array<i32: 0>} : vector<128x128xi32>
      %49 = vector.broadcast %27 : i32 to vector<128x128xi32>
      %50 = arith.addi %49, %48 : vector<128x128xi32>
      %51 = tpu.iota {dimensions = array<i32: 1>} : vector<128x128xi32>
      %52 = vector.broadcast %28 : i32 to vector<128x128xi32>
      %53 = arith.addi %52, %51 : vector<128x128xi32>
      %54 = arith.cmpi ne, %50, %53 : vector<128x128xi32>
      %c8_i32_26 = arith.constant 8 : i32
      %55 = vector.broadcast %c8_i32_26 : i32 to vector<128x128xi32>
      %56 = arith.cmpi slt, %50, %55 : vector<128x128xi32>
      %57 = arith.andi %54, %56 : vector<128x128xi1>
      %c8_i32_27 = arith.constant 8 : i32
      %58 = vector.broadcast %c8_i32_27 : i32 to vector<128x128xi32>
      %59 = arith.cmpi slt, %53, %58 : vector<128x128xi32>
      %60 = arith.andi %57, %59 : vector<128x128xi1>
      %c0_28 = arith.constant 0 : index
      %c0_29 = arith.constant 0 : index
      %61 = vector.load %arg9[%c0_28, %c0_29] : memref<128x128xf32, #tpu.memory_space<vmem>>, vector<128x128xf32>
      %cst_30 = arith.constant 0.000000e+00 : f32
      %62 = vector.broadcast %cst_30 : f32 to vector<128x128xf32>
      %63 = arith.select %60, %26, %62 : vector<128x128xi1>, vector<128x128xf32>
      %64 = arith.addf %61, %63 : vector<128x128xf32>
      %c0_31 = arith.constant 0 : index
      %c0_32 = arith.constant 0 : index
      %65 = vector.load %arg9[%c0_31, %c0_32] : memref<128x128xf32, #tpu.memory_space<vmem>>, vector<128x128xf32>
      tpu.vector_store %arg9[%c0_31, %c0_32], %64 {strides = array<i32>} : memref<128x128xf32, #tpu.memory_space<vmem>>, vector<128x128xf32>,
    } else {
    }
    %true = arith.constant true
    %42 = arith.xori %39, %true : i1
    %43 = arith.extui %42 : i1 to i32
    %c0_i32_23 = arith.constant 0 : i32
    %44 = arith.cmpi ne, %43, %c0_i32_23 : i32
    scf.if %44 {
      %c0_26 = arith.constant 0 : index
      %c0_27 = arith.constant 0 : index
      %48 = vector.load %arg9[%c0_26, %c0_27] : memref<128x128xf32, #tpu.memory_space<vmem>>, vector<128x128xf32>
      %49 = arith.addf %48, %26 : vector<128x128xf32>
      %c0_28 = arith.constant 0 : index
      %c0_29 = arith.constant 0 : index
      %50 = vector.load %arg9[%c0_28, %c0_29] : memref<128x128xf32, #tpu.memory_space<vmem>>, vector<128x128xf32>
      tpu.vector_store %arg9[%c0_28, %c0_29], %49 {strides = array<i32>} : memref<128x128xf32, #tpu.memory_space<vmem>>, vector<128x128xf32>,
    } else {
    }
    %c0_i32_24 = arith.constant 0 : i32
    %45 = arith.cmpi eq, %arg1, %c0_i32_24 : i32
    %46 = arith.extui %45 : i1 to i32
    %c0_i32_25 = arith.constant 0 : i32
    %47 = arith.cmpi ne, %46, %c0_i32_25 : i32
    scf.if %47 {
      %c0_26 = arith.constant 0 : index
      %c0_27 = arith.constant 0 : index
      %48 = vector.load %arg9[%c0_26, %c0_27] : memref<128x128xf32, #tpu.memory_space<vmem>>, vector<128x128xf32>
      %cst_28 = arith.constant dense<0.000000e+00> : vector<128xf32>
      %49 = vector.multi_reduction <add>, %48, %cst_28 [1] : vector<128x128xf32> to vector<128xf32>
      %50 = vector.shape_cast %49 : vector<128xf32> to vector<128x1xf32>
      %c0_29 = arith.constant 0 : index
      %c0_30 = arith.constant 0 : index
      %51 = vector.load %arg8[%c0_29, %c0_30] : memref<128x1xf32, #tpu.memory_space<vmem>>, vector<128x1xf32>
      tpu.vector_store %arg8[%c0_29, %c0_30], %50 {strides = array<i32>} : memref<128x1xf32, #tpu.memory_space<vmem>>, vector<128x1xf32>,
    } else {
    }
    return
  }
  func.func @transform_0(%arg0: i32, %arg1: i32) -> (i32, i32) {
    %c0_i32 = arith.constant 0 : i32
    %c0_i32_0 = arith.constant 0 : i32
    return %arg0, %c0_i32 : i32, i32
  }
  func.func @transform_1(%arg0: i32, %arg1: i32) -> (i32, i32) {
    %c0_i32 = arith.constant 0 : i32
    %c0_i32_0 = arith.constant 0 : i32
    return %arg1, %c0_i32 : i32, i32
  }
  func.func @transform_2(%arg0: i32, %arg1: i32) -> (i32, i32) {
    %c0_i32 = arith.constant 0 : i32
    %c0_i32_0 = arith.constant 0 : i32
    return %arg0, %c0_i32 : i32, i32
  }
  func.func @transform_3(%arg0: i32, %arg1: i32) -> (i32, i32) {
    %c0_i32 = arith.constant 0 : i32
    %c0_i32_0 = arith.constant 0 : i32
    return %c0_i32, %arg1 : i32, i32
  }
  func.func @transform_4(%arg0: i32, %arg1: i32) -> (i32, i32) {
    %c0_i32 = arith.constant 0 : i32
    %c0_i32_0 = arith.constant 0 : i32
    return %arg0, %c0_i32 : i32, i32
  }
  func.func @transform_5(%arg0: i32, %arg1: i32) -> (i32, i32) {
    %c0_i32 = arith.constant 0 : i32
    %c0_i32_0 = arith.constant 0 : i32
    return %c0_i32, %arg1 : i32, i32
  }
  func.func @transform_6(%arg0: i32, %arg1: i32) -> (i32, i32) {
    %c0_i32 = arith.constant 0 : i32
    %c0_i32_0 = arith.constant 0 : i32
    return %arg0, %c0_i32 : i32, i32
  }
}

</mosaic_0001>

<llo_original>
// kernel: tpu_custom_call.1
$region0: #{tpu_custom_call.1}
  #allocation0 [shape = 'u32[]', space=smem, size = 0x4, offset = 0x4, fixed_abs, tag = 'smem constant byte address 0x4 - core index']
  #allocation1 [shape = 'u32[144,128]{1,0:T(1,128)}', space=vmem, size = 0x12000, scoped, tag = 'internal scratch']
  #allocation2 [shape = 'f32[128,128]{1,0:T(8,128)}', space=vmem, size = 0x10000, scoped, tag = 'scratch operand']
  %s0 = inlined_call_operand.vmem [shape: f32[128,128], index: 0, kind: input, shape index: {}]
  %s1 = inlined_call_operand.vmem [shape: f32[128,128], index: 1, kind: input, shape index: {}]
  %s2 = inlined_call_operand.vmem [shape: f32[128,1], index: 2, kind: input, shape index: {}]
  %s3 = inlined_call_operand.vmem [shape: f32[1,128], index: 3, kind: input, shape index: {}]
  %s4 = inlined_call_operand.vmem [shape: f32[128,1], index: 4, kind: input, shape index: {}]
  %s5 = inlined_call_operand.vmem [shape: f32[1,128], index: 5, kind: input, shape index: {}]
  %s6 = inlined_call_operand.vmem [shape: f32[128,1], index: 6, kind: output, shape index: {}]
  %s7 = sld [smem:[#allocation0]]
  $region50: #{tpu_custom_call.1} parent=0
    _
  %s9 = ssub.s32 1, %s7
  %s10 = scalar_select 0, %s9, %s7
  // Predicated region
  $region2: #{tpu_custom_call.1} parent=0 // pred_check
    _
  $region3: #{tpu_custom_call.1} parent=0 // pred_check_branch
    %12 = sbr.rel (0) target = $region5
  $region4: #{tpu_custom_call.1} parent=0 // pred_region
    _
  $region5: #{tpu_custom_call.1} parent=0 // pred_fallthru
    _
  // Predicated region
  $region6: #{tpu_custom_call.1} parent=0 // pred_check
    _
  $region7: #{tpu_custom_call.1} parent=0 // pred_check_branch
    %14 = sbr.rel (0) target = $region9
  $region8: #{tpu_custom_call.1} parent=0 // pred_region
    _
  $region9: #{tpu_custom_call.1} parent=0 // pred_fallthru
    _
  // Predicated region
  $region10: #{tpu_custom_call.1} parent=0 // pred_check
    _
  $region11: #{tpu_custom_call.1} parent=0 // pred_check_branch
    %16 = sbr.rel (0) target = $region13
  $region12: #{tpu_custom_call.1} parent=0 // pred_region
    _
  $region13: #{tpu_custom_call.1} parent=0 // pred_fallthru
    _
  // Predicated region
  $region14: #{tpu_custom_call.1} parent=0 // pred_check
    _
  $region15: #{tpu_custom_call.1} parent=0 // pred_check_branch
    %18 = sbr.rel (0) target = $region17
  $region16: #{tpu_custom_call.1} parent=0 // pred_region
    _
  $region17: #{tpu_custom_call.1} parent=0 // pred_fallthru
    _
  // Predicated region
  $region18: #{tpu_custom_call.1} parent=0 // pred_check
    _
  $region19: #{tpu_custom_call.1} parent=0 // pred_check_branch
    %20 = sbr.rel (0) target = $region21
  $region20: #{tpu_custom_call.1} parent=0 // pred_region
    _
  $region21: #{tpu_custom_call.1} parent=0 // pred_fallthru
    _
  // Predicated region
  $region22: #{tpu_custom_call.1} parent=0 // pred_check
    _
  $region23: #{tpu_custom_call.1} parent=0 // pred_check_branch
    %22 = sbr.rel (0) target = $region25
  $region24: #{tpu_custom_call.1} parent=0 // pred_region
    _
  $region25: #{tpu_custom_call.1} parent=0 // pred_fallthru
    _
  %p23 = scmp.eq.s32.totalorder 0, 0
  // Predicated region
  $region26: #{tpu_custom_call.1} parent=0 // pred_check
    %p24 = pneg %p23
  $region27: #{tpu_custom_call.1} parent=0 // pred_check_branch
    %26 = sbr.rel (%p24) target = $region29
  $region28: #{tpu_custom_call.1} parent=0 // pred_region
    %27 = vst [vmem:[#allocation2] sm:$0xff] 0.0
    %28 = vst [vmem:[#allocation2 + $0x8] sm:$0xff] 0.0
    %29 = vst [vmem:[#allocation2 + $0x10] sm:$0xff] 0.0
    %30 = vst [vmem:[#allocation2 + $0x18] sm:$0xff] 0.0
    %31 = vst [vmem:[#allocation2 + $0x20] sm:$0xff] 0.0
    %32 = vst [vmem:[#allocation2 + $0x28] sm:$0xff] 0.0
    %33 = vst [vmem:[#allocation2 + $0x30] sm:$0xff] 0.0
    %34 = vst [vmem:[#allocation2 + $0x38] sm:$0xff] 0.0
    %35 = vst [vmem:[#allocation2 + $0x40] sm:$0xff] 0.0
    %36 = vst [vmem:[#allocation2 + $0x48] sm:$0xff] 0.0
    %37 = vst [vmem:[#allocation2 + $0x50] sm:$0xff] 0.0
    %38 = vst [vmem:[#allocation2 + $0x58] sm:$0xff] 0.0
    %39 = vst [vmem:[#allocation2 + $0x60] sm:$0xff] 0.0
    %40 = vst [vmem:[#allocation2 + $0x68] sm:$0xff] 0.0
    %41 = vst [vmem:[#allocation2 + $0x70] sm:$0xff] 0.0
    %42 = vst [vmem:[#allocation2 + $0x78] sm:$0xff] 0.0
  $region29: #{tpu_custom_call.1} parent=0 // pred_fallthru
    _
  %v43 = vld [vmem:[%s0] sm:$0xff]
  %v44 = vld [vmem:[%s0 + $0x8] sm:$0xff]
  %v45 = vld [vmem:[%s0 + $0x10] sm:$0xff]
  %v46 = vld [vmem:[%s0 + $0x18] sm:$0xff]
  %v47 = vld [vmem:[%s0 + $0x20] sm:$0xff]
  %v48 = vld [vmem:[%s0 + $0x28] sm:$0xff]
  %v49 = vld [vmem:[%s0 + $0x30] sm:$0xff]
  %v50 = vld [vmem:[%s0 + $0x38] sm:$0xff]
  %v51 = vld [vmem:[%s0 + $0x40] sm:$0xff]
  %v52 = vld [vmem:[%s0 + $0x48] sm:$0xff]
  %v53 = vld [vmem:[%s0 + $0x50] sm:$0xff]
  %v54 = vld [vmem:[%s0 + $0x58] sm:$0xff]
  %v55 = vld [vmem:[%s0 + $0x60] sm:$0xff]
  %v56 = vld [vmem:[%s0 + $0x68] sm:$0xff]
  %v57 = vld [vmem:[%s0 + $0x70] sm:$0xff]
  %v58 = vld [vmem:[%s0 + $0x78] sm:$0xff]
  %v59 = vld [vmem:[%s1] sm:$0xff]
  %v60 = vld [vmem:[%s1 + $0x8] sm:$0xff]
  %v61 = vld [vmem:[%s1 + $0x10] sm:$0xff]
  %v62 = vld [vmem:[%s1 + $0x18] sm:$0xff]
  %v63 = vld [vmem:[%s1 + $0x20] sm:$0xff]
  %v64 = vld [vmem:[%s1 + $0x28] sm:$0xff]
  %v65 = vld [vmem:[%s1 + $0x30] sm:$0xff]
  %v66 = vld [vmem:[%s1 + $0x38] sm:$0xff]
  %v67 = vld [vmem:[%s1 + $0x40] sm:$0xff]
  %v68 = vld [vmem:[%s1 + $0x48] sm:$0xff]
  %v69 = vld [vmem:[%s1 + $0x50] sm:$0xff]
  %v70 = vld [vmem:[%s1 + $0x58] sm:$0xff]
  %v71 = vld [vmem:[%s1 + $0x60] sm:$0xff]
  %v72 = vld [vmem:[%s1 + $0x68] sm:$0xff]
  %v73 = vld [vmem:[%s1 + $0x70] sm:$0xff]
  %v74 = vld [vmem:[%s1 + $0x78] sm:$0xff]
  %75 = vmatprep.subr.mxu0 0.0
  %76 = vmatpush1.xpose.msra.mxu0 %v59
  %77 = vmatprep.subr.mxu0 0.0
  %78 = vmatpush1.xpose.msra.mxu0 %v60
  %79 = vmatprep.subr.mxu0 0.0
  %80 = vmatpush1.xpose.msra.mxu0 %v61
  %81 = vmatprep.subr.mxu0 0.0
  %82 = vmatpush1.xpose.msra.mxu0 %v62
  %83 = vmatprep.subr.mxu0 0.0
  %84 = vmatpush1.xpose.msra.mxu0 %v63
  %85 = vmatprep.subr.mxu0 0.0
  %86 = vmatpush1.xpose.msra.mxu0 %v64
  %87 = vmatprep.subr.mxu0 0.0
  %88 = vmatpush1.xpose.msra.mxu0 %v65
  %89 = vmatprep.subr.mxu0 0.0
  %90 = vmatpush1.xpose.msra.mxu0 %v66
  %91 = vmatprep.subr.mxu0 0.0
  %92 = vmatpush1.xpose.msra.mxu0 %v67
  %93 = vmatprep.subr.mxu0 0.0
  %94 = vmatpush1.xpose.msra.mxu0 %v68
  %95 = vmatprep.subr.mxu0 0.0
  %96 = vmatpush1.xpose.msra.mxu0 %v69
  %97 = vmatprep.subr.mxu0 0.0
  %98 = vmatpush1.xpose.msra.mxu0 %v70
  %99 = vmatprep.subr.mxu0 0.0
  %100 = vmatpush1.xpose.msra.mxu0 %v71
  %101 = vmatprep.subr.mxu0 0.0
  %102 = vmatpush1.xpose.msra.mxu0 %v72
  %103 = vmatprep.subr.mxu0 0.0
  %104 = vmatpush1.xpose.msra.mxu0 %v73
  %105 = vmatprep.subr.mxu0 0.0
  %106 = vmatpush1.xpose.msra.mxu0 %v74
  %107 = vmatprep.subr.mxu0 0.0
  %108 = vmatpush1.xpose.msra.mxu0 0.0
  %109 = vmatprep.subr.mxu0 0.0
  %110 = vmatpush1.xpose.msra.mxu0 0.0
  %111 = vmatprep.subr.mxu0 0.0
  %112 = vmatpush1.xpose.msra.mxu0 0.0
  %113 = vmatprep.subr.mxu0 0.0
  %114 = vmatpush1.xpose.msra.mxu0 0.0
  %115 = vmatprep.subr.mxu0 0.0
  %116 = vmatpush1.xpose.msra.mxu0 0.0
  %117 = vmatprep.subr.mxu0 0.0
  %118 = vmatpush1.xpose.msra.mxu0 0.0
  %119 = vmatprep.subr.mxu0 0.0
  %120 = vmatpush1.xpose.msra.mxu0 0.0
  %121 = vmatprep.subr.mxu0 0.0
  %122 = vmatpush1.xpose.msra.mxu0 0.0
  %123 = vmatprep.subr.mxu0 0.0
  %124 = vmatpush1.xpose.msra.mxu0 0.0
  %125 = vmatprep.subr.mxu0 0.0
  %126 = vmatpush1.xpose.msra.mxu0 0.0
  %127 = vmatprep.subr.mxu0 0.0
  %128 = vmatpush1.xpose.msra.mxu0 0.0
  %129 = vmatprep.subr.mxu0 0.0
  %130 = vmatpush1.xpose.msra.mxu0 0.0
  %131 = vmatprep.subr.mxu0 0.0
  %132 = vmatpush1.xpose.msra.mxu0 0.0
  %133 = vmatprep.subr.mxu0 0.0
  %134 = vmatpush1.xpose.msra.mxu0 0.0
  %135 = vmatprep.subr.mxu0 0.0
  %136 = vmatpush1.xpose.msra.mxu0 0.0
  %137 = vmatprep.subr.mxu0 0.0
  %138 = vmatpush1.xpose.msra.mxu0 0.0
  %139 = vmatprep.mubr.f32.mxu0 0.0
  %140 = vmatmul.mubr.f32.gmra.mrb[0].mxu0 %v43
  %v141 = vpop.f32.mrb[0].mxu0
  %v142 = vadd.f32 0.0, %v141
  %v143 = vpop.f32.mrb[0].mxu0
  %144 = vmatprep.mubr.f32.mxu0 0.0
  %145 = vmatmul.mubr.f32.gmra.mrb[0].mxu0 %v44
  %v146 = vpop.f32.mrb[0].mxu0
  %v147 = vadd.f32 0.0, %v146
  %v148 = vpop.f32.mrb[0].mxu0
  %149 = vmatprep.mubr.f32.mxu0 0.0
  %150 = vmatmul.mubr.f32.gmra.mrb[0].mxu0 %v45
  %v151 = vpop.f32.mrb[0].mxu0
  %v152 = vadd.f32 0.0, %v151
  %v153 = vpop.f32.mrb[0].mxu0
  %154 = vmatprep.mubr.f32.mxu0 0.0
  %155 = vmatmul.mubr.f32.gmra.mrb[0].mxu0 %v46
  %v156 = vpop.f32.mrb[0].mxu0
  %v157 = vadd.f32 0.0, %v156
  %v158 = vpop.f32.mrb[0].mxu0
  %159 = vmatprep.mubr.f32.mxu0 0.0
  %160 = vmatmul.mubr.f32.gmra.mrb[0].mxu0 %v47
  %v161 = vpop.f32.mrb[0].mxu0
  %v162 = vadd.f32 0.0, %v161
  %v163 = vpop.f32.mrb[0].mxu0
  %164 = vmatprep.mubr.f32.mxu0 0.0
  %165 = vmatmul.mubr.f32.gmra.mrb[0].mxu0 %v48
  %v166 = vpop.f32.mrb[0].mxu0
  %v167 = vadd.f32 0.0, %v166
  %v168 = vpop.f32.mrb[0].mxu0
  %169 = vmatprep.mubr.f32.mxu0 0.0
  %170 = vmatmul.mubr.f32.gmra.mrb[0].mxu0 %v49
  %v171 = vpop.f32.mrb[0].mxu0
  %v172 = vadd.f32 0.0, %v171
  %v173 = vpop.f32.mrb[0].mxu0
  %174 = vmatprep.mubr.f32.mxu0 0.0
  %175 = vmatmul.mubr.f32.gmra.mrb[0].mxu0 %v50
  %v176 = vpop.f32.mrb[0].mxu0
  %v177 = vadd.f32 0.0, %v176
  %v178 = vpop.f32.mrb[0].mxu0
  %179 = vmatprep.mubr.f32.mxu0 0.0
  %180 = vmatmul.mubr.f32.gmra.mrb[0].mxu0 %v51
  %v181 = vpop.f32.mrb[0].mxu0
  %v182 = vadd.f32 0.0, %v181
  %v183 = vpop.f32.mrb[0].mxu0
  %184 = vmatprep.mubr.f32.mxu0 0.0
  %185 = vmatmul.mubr.f32.gmra.mrb[0].mxu0 %v52
  %v186 = vpop.f32.mrb[0].mxu0
  %v187 = vadd.f32 0.0, %v186
  %v188 = vpop.f32.mrb[0].mxu0
  %189 = vmatprep.mubr.f32.mxu0 0.0
  %190 = vmatmul.mubr.f32.gmra.mrb[0].mxu0 %v53
  %v191 = vpop.f32.mrb[0].mxu0
  %v192 = vadd.f32 0.0, %v191
  %v193 = vpop.f32.mrb[0].mxu0
  %194 = vmatprep.mubr.f32.mxu0 0.0
  %195 = vmatmul.mubr.f32.gmra.mrb[0].mxu0 %v54
  %v196 = vpop.f32.mrb[0].mxu0
  %v197 = vadd.f32 0.0, %v196
  %v198 = vpop.f32.mrb[0].mxu0
  %199 = vmatprep.mubr.f32.mxu0 0.0
  %200 = vmatmul.mubr.f32.gmra.mrb[0].mxu0 %v55
  %v201 = vpop.f32.mrb[0].mxu0
  %v202 = vadd.f32 0.0, %v201
  %v203 = vpop.f32.mrb[0].mxu0
  %204 = vmatprep.mubr.f32.mxu0 0.0
  %205 = vmatmul.mubr.f32.gmra.mrb[0].mxu0 %v56
  %v206 = vpop.f32.mrb[0].mxu0
  %v207 = vadd.f32 0.0, %v206
  %v208 = vpop.f32.mrb[0].mxu0
  %209 = vmatprep.mubr.f32.mxu0 0.0
  %210 = vmatmul.mubr.f32.gmra.mrb[0].mxu0 %v57
  %v211 = vpop.f32.mrb[0].mxu0
  %v212 = vadd.f32 0.0, %v211
  %v213 = vpop.f32.mrb[0].mxu0
  %214 = vmatprep.mubr.f32.mxu0 0.0
  %215 = vmatmul.mubr.f32.gmra.mrb[0].mxu0 %v58
  %v216 = vpop.f32.mrb[0].mxu0
  %v217 = vadd.f32 0.0, %v216
  %v218 = vpop.f32.mrb[0].mxu0
  %219 = vdwg.mxu0
  %v220 = vld [vmem:[%s2] sm:$0xff]
  %v221 = vld [vmem:[%s2 + $0x8] sm:$0xff]
  %v222 = vld [vmem:[%s2 + $0x10] sm:$0xff]
  %v223 = vld [vmem:[%s2 + $0x18] sm:$0xff]
  %v224 = vld [vmem:[%s2 + $0x20] sm:$0xff]
  %v225 = vld [vmem:[%s2 + $0x28] sm:$0xff]
  %v226 = vld [vmem:[%s2 + $0x30] sm:$0xff]
  %v227 = vld [vmem:[%s2 + $0x38] sm:$0xff]
  %v228 = vld [vmem:[%s2 + $0x40] sm:$0xff]
  %v229 = vld [vmem:[%s2 + $0x48] sm:$0xff]
  %v230 = vld [vmem:[%s2 + $0x50] sm:$0xff]
  %v231 = vld [vmem:[%s2 + $0x58] sm:$0xff]
  %v232 = vld [vmem:[%s2 + $0x60] sm:$0xff]
  %v233 = vld [vmem:[%s2 + $0x68] sm:$0xff]
  %v234 = vld [vmem:[%s2 + $0x70] sm:$0xff]
  %v235 = vld [vmem:[%s2 + $0x78] sm:$0xff]
  %237 = vset.pattern.permute.xlu0 0
  %238 = vperm.xlu0 %237, %v220
  %v239 = vpop.permute.xlu0 %238
  %242 = vset.pattern.permute.xlu0 0
  %243 = vperm.xlu0 %242, %v221
  %v244 = vpop.permute.xlu0 %243
  %247 = vset.pattern.permute.xlu0 0
  %248 = vperm.xlu0 %247, %v222
  %v249 = vpop.permute.xlu0 %248
  %252 = vset.pattern.permute.xlu0 0
  %253 = vperm.xlu0 %252, %v223
  %v254 = vpop.permute.xlu0 %253
  %257 = vset.pattern.permute.xlu0 0
  %258 = vperm.xlu0 %257, %v224
  %v259 = vpop.permute.xlu0 %258
  %262 = vset.pattern.permute.xlu0 0
  %263 = vperm.xlu0 %262, %v225
  %v264 = vpop.permute.xlu0 %263
  %267 = vset.pattern.permute.xlu0 0
  %268 = vperm.xlu0 %267, %v226
  %v269 = vpop.permute.xlu0 %268
  %272 = vset.pattern.permute.xlu0 0
  %273 = vperm.xlu0 %272, %v227
  %v274 = vpop.permute.xlu0 %273
  %277 = vset.pattern.permute.xlu0 0
  %278 = vperm.xlu0 %277, %v228
  %v279 = vpop.permute.xlu0 %278
  %282 = vset.pattern.permute.xlu0 0
  %283 = vperm.xlu0 %282, %v229
  %v284 = vpop.permute.xlu0 %283
  %287 = vset.pattern.permute.xlu0 0
  %288 = vperm.xlu0 %287, %v230
  %v289 = vpop.permute.xlu0 %288
  %292 = vset.pattern.permute.xlu0 0
  %293 = vperm.xlu0 %292, %v231
  %v294 = vpop.permute.xlu0 %293
  %297 = vset.pattern.permute.xlu0 0
  %298 = vperm.xlu0 %297, %v232
  %v299 = vpop.permute.xlu0 %298
  %302 = vset.pattern.permute.xlu0 0
  %303 = vperm.xlu0 %302, %v233
  %v304 = vpop.permute.xlu0 %303
  %307 = vset.pattern.permute.xlu0 0
  %308 = vperm.xlu0 %307, %v234
  %v309 = vpop.permute.xlu0 %308
  %312 = vset.pattern.permute.xlu0 0
  %313 = vperm.xlu0 %312, %v235
  %v314 = vpop.permute.xlu0 %313
  %v316 = vmul.f32 %v142, %v239
  %v317 = vmul.f32 %v147, %v244
  %v318 = vmul.f32 %v152, %v249
  %v319 = vmul.f32 %v157, %v254
  %v320 = vmul.f32 %v162, %v259
  %v321 = vmul.f32 %v167, %v264
  %v322 = vmul.f32 %v172, %v269
  %v323 = vmul.f32 %v177, %v274
  %v324 = vmul.f32 %v182, %v279
  %v325 = vmul.f32 %v187, %v284
  %v326 = vmul.f32 %v192, %v289
  %v327 = vmul.f32 %v197, %v294
  %v328 = vmul.f32 %v202, %v299
  %v329 = vmul.f32 %v207, %v304
  %v330 = vmul.f32 %v212, %v309
  %v331 = vmul.f32 %v217, %v314
  %v332 = vld [vmem:[%s3] sm:$0x1]
  %v334 = vlaneseq
  %v335 = vshrl.u32 %v334, 7
  %v336 = vsub.s32 0, %v335
  %v337 = vrot.slane %v332, %v336
  %v339 = vmul.f32 %v316, %v337
  %v340 = vmul.f32 %v317, %v337
  %v341 = vmul.f32 %v318, %v337
  %v342 = vmul.f32 %v319, %v337
  %v343 = vmul.f32 %v320, %v337
  %v344 = vmul.f32 %v321, %v337
  %v345 = vmul.f32 %v322, %v337
  %v346 = vmul.f32 %v323, %v337
  %v347 = vmul.f32 %v324, %v337
  %v348 = vmul.f32 %v325, %v337
  %v349 = vmul.f32 %v326, %v337
  %v350 = vmul.f32 %v327, %v337
  %v351 = vmul.f32 %v328, %v337
  %v352 = vmul.f32 %v329, %v337
  %v353 = vmul.f32 %v330, %v337
  %v354 = vmul.f32 %v331, %v337
  %v355 = vadd.f32 %v339, 0.0
  %v356 = vadd.f32 %v340, 0.0
  %v357 = vadd.f32 %v341, 0.0
  %v358 = vadd.f32 %v342, 0.0
  %v359 = vadd.f32 %v343, 0.0
  %v360 = vadd.f32 %v344, 0.0
  %v361 = vadd.f32 %v345, 0.0
  %v362 = vadd.f32 %v346, 0.0
  %v363 = vadd.f32 %v347, 0.0
  %v364 = vadd.f32 %v348, 0.0
  %v365 = vadd.f32 %v349, 0.0
  %v366 = vadd.f32 %v350, 0.0
  %v367 = vadd.f32 %v351, 0.0
  %v368 = vadd.f32 %v352, 0.0
  %v369 = vadd.f32 %v353, 0.0
  %v370 = vadd.f32 %v354, 0.0
  %v371 = vld [vmem:[%s4] sm:$0xff]
  %v372 = vld [vmem:[%s4 + $0x8] sm:$0xff]
  %v373 = vld [vmem:[%s4 + $0x10] sm:$0xff]
  %v374 = vld [vmem:[%s4 + $0x18] sm:$0xff]
  %v375 = vld [vmem:[%s4 + $0x20] sm:$0xff]
  %v376 = vld [vmem:[%s4 + $0x28] sm:$0xff]
  %v377 = vld [vmem:[%s4 + $0x30] sm:$0xff]
  %v378 = vld [vmem:[%s4 + $0x38] sm:$0xff]
  %v379 = vld [vmem:[%s4 + $0x40] sm:$0xff]
  %v380 = vld [vmem:[%s4 + $0x48] sm:$0xff]
  %v381 = vld [vmem:[%s4 + $0x50] sm:$0xff]
  %v382 = vld [vmem:[%s4 + $0x58] sm:$0xff]
  %v383 = vld [vmem:[%s4 + $0x60] sm:$0xff]
  %v384 = vld [vmem:[%s4 + $0x68] sm:$0xff]
  %v385 = vld [vmem:[%s4 + $0x70] sm:$0xff]
  %v386 = vld [vmem:[%s4 + $0x78] sm:$0xff]
  %388 = vset.pattern.permute.xlu0 0
  %389 = vperm.xlu0 %388, %v371
  %v390 = vpop.permute.xlu0 %389
  %393 = vset.pattern.permute.xlu0 0
  %394 = vperm.xlu0 %393, %v372
  %v395 = vpop.permute.xlu0 %394
  %398 = vset.pattern.permute.xlu0 0
  %399 = vperm.xlu0 %398, %v373
  %v400 = vpop.permute.xlu0 %399
  %403 = vset.pattern.permute.xlu0 0
  %404 = vperm.xlu0 %403, %v374
  %v405 = vpop.permute.xlu0 %404
  %408 = vset.pattern.permute.xlu0 0
  %409 = vperm.xlu0 %408, %v375
  %v410 = vpop.permute.xlu0 %409
  %413 = vset.pattern.permute.xlu0 0
  %414 = vperm.xlu0 %413, %v376
  %v415 = vpop.permute.xlu0 %414
  %418 = vset.pattern.permute.xlu0 0
  %419 = vperm.xlu0 %418, %v377
  %v420 = vpop.permute.xlu0 %419
  %423 = vset.pattern.permute.xlu0 0
  %424 = vperm.xlu0 %423, %v378
  %v425 = vpop.permute.xlu0 %424
  %428 = vset.pattern.permute.xlu0 0
  %429 = vperm.xlu0 %428, %v379
  %v430 = vpop.permute.xlu0 %429
  %433 = vset.pattern.permute.xlu0 0
  %434 = vperm.xlu0 %433, %v380
  %v435 = vpop.permute.xlu0 %434
  %438 = vset.pattern.permute.xlu0 0
  %439 = vperm.xlu0 %438, %v381
  %v440 = vpop.permute.xlu0 %439
  %443 = vset.pattern.permute.xlu0 0
  %444 = vperm.xlu0 %443, %v382
  %v445 = vpop.permute.xlu0 %444
  %448 = vset.pattern.permute.xlu0 0
  %449 = vperm.xlu0 %448, %v383
  %v450 = vpop.permute.xlu0 %449
  %453 = vset.pattern.permute.xlu0 0
  %454 = vperm.xlu0 %453, %v384
  %v455 = vpop.permute.xlu0 %454
  %458 = vset.pattern.permute.xlu0 0
  %459 = vperm.xlu0 %458, %v385
  %v460 = vpop.permute.xlu0 %459
  %463 = vset.pattern.permute.xlu0 0
  %464 = vperm.xlu0 %463, %v386
  %v465 = vpop.permute.xlu0 %464
  %v467 = vsub.f32 %v355, %v390
  %v468 = vsub.f32 %v356, %v395
  %v469 = vsub.f32 %v357, %v400
  %v470 = vsub.f32 %v358, %v405
  %v471 = vsub.f32 %v359, %v410
  %v472 = vsub.f32 %v360, %v415
  %v473 = vsub.f32 %v361, %v420
  %v474 = vsub.f32 %v362, %v425
  %v475 = vsub.f32 %v363, %v430
  %v476 = vsub.f32 %v364, %v435
  %v477 = vsub.f32 %v365, %v440
  %v478 = vsub.f32 %v366, %v445
  %v479 = vsub.f32 %v367, %v450
  %v480 = vsub.f32 %v368, %v455
  %v481 = vsub.f32 %v369, %v460
  %v482 = vsub.f32 %v370, %v465
  %v483 = vmax.f32 %v467, 0.0
  %v484 = vmax.f32 %v468, 0.0
  %v485 = vmax.f32 %v469, 0.0
  %v486 = vmax.f32 %v470, 0.0
  %v487 = vmax.f32 %v471, 0.0
  %v488 = vmax.f32 %v472, 0.0
  %v489 = vmax.f32 %v473, 0.0
  %v490 = vmax.f32 %v474, 0.0
  %v491 = vmax.f32 %v475, 0.0
  %v492 = vmax.f32 %v476, 0.0
  %v493 = vmax.f32 %v477, 0.0
  %v494 = vmax.f32 %v478, 0.0
  %v495 = vmax.f32 %v479, 0.0
  %v496 = vmax.f32 %v480, 0.0
  %v497 = vmax.f32 %v481, 0.0
  %v498 = vmax.f32 %v482, 0.0
  %v499 = vld [vmem:[%s5] sm:$0x1]
  %v501 = vlaneseq
  %v502 = vshrl.u32 %v501, 7
  %v503 = vsub.s32 0, %v502
  %v504 = vrot.slane %v499, %v503
  %v506 = vsub.f32 %v355, %v504
  %v507 = vsub.f32 %v356, %v504
  %v508 = vsub.f32 %v357, %v504
  %v509 = vsub.f32 %v358, %v504
  %v510 = vsub.f32 %v359, %v504
  %v511 = vsub.f32 %v360, %v504
  %v512 = vsub.f32 %v361, %v504
  %v513 = vsub.f32 %v362, %v504
  %v514 = vsub.f32 %v363, %v504
  %v515 = vsub.f32 %v364, %v504
  %v516 = vsub.f32 %v365, %v504
  %v517 = vsub.f32 %v366, %v504
  %v518 = vsub.f32 %v367, %v504
  %v519 = vsub.f32 %v368, %v504
  %v520 = vsub.f32 %v369, %v504
  %v521 = vsub.f32 %v370, %v504
  %v522 = vmax.f32 %v506, 0.0
  %v523 = vmax.f32 %v507, 0.0
  %v524 = vmax.f32 %v508, 0.0
  %v525 = vmax.f32 %v509, 0.0
  %v526 = vmax.f32 %v510, 0.0
  %v527 = vmax.f32 %v511, 0.0
  %v528 = vmax.f32 %v512, 0.0
  %v529 = vmax.f32 %v513, 0.0
  %v530 = vmax.f32 %v514, 0.0
  %v531 = vmax.f32 %v515, 0.0
  %v532 = vmax.f32 %v516, 0.0
  %v533 = vmax.f32 %v517, 0.0
  %v534 = vmax.f32 %v518, 0.0
  %v535 = vmax.f32 %v519, 0.0
  %v536 = vmax.f32 %v520, 0.0
  %v537 = vmax.f32 %v521, 0.0
  %v538 = vadd.f32 %v483, %v522
  %v539 = vadd.f32 %v484, %v523
  %v540 = vadd.f32 %v485, %v524
  %v541 = vadd.f32 %v486, %v525
  %v542 = vadd.f32 %v487, %v526
  %v543 = vadd.f32 %v488, %v527
  %v544 = vadd.f32 %v489, %v528
  %v545 = vadd.f32 %v490, %v529
  %v546 = vadd.f32 %v491, %v530
  %v547 = vadd.f32 %v492, %v531
  %v548 = vadd.f32 %v493, %v532
  %v549 = vadd.f32 %v494, %v533
  %v550 = vadd.f32 %v495, %v534
  %v551 = vadd.f32 %v496, %v535
  %v552 = vadd.f32 %v497, %v536
  %v553 = vadd.f32 %v498, %v537
  %s554 = smul.u32 0, 128
  %s555 = smul.u32 0, 128
  %s556 = sadd.s32 %s555, 128
  %p557 = scmp.lt.s32.totalorder %s554, %s556
  %s558 = sadd.s32 %s554, 128
  %p559 = scmp.lt.s32.totalorder %s555, %s558
  %p560 = pnand %p557, %p559
  %p561 = pneg %p560
  %p562 = scmp.gt.s32.totalorder %s558, 8
  %p563 = scmp.gt.s32.totalorder %s556, 8
  %p564 = por %p562, %p563
  %p565 = por %p561, %p564
  // Predicated region
  $region30: #{tpu_custom_call.1} parent=0 // pred_check
    %p566 = pneg %p565
  $region31: #{tpu_custom_call.1} parent=0 // pred_check_branch
    %568 = sbr.rel (%p566) target = $region33
  $region32: #{tpu_custom_call.1} parent=0 // pred_region
    %v569 = vlaneseq
    %v570 = vshrl.u32 %v569, 7
    %v571 = vadd.s32 %v570, 8
    %v572 = vadd.s32 %v570, 16
    %v573 = vadd.s32 %v570, 24
    %v574 = vadd.s32 %v570, 32
    %v575 = vadd.s32 %v570, 40
    %v576 = vadd.s32 %v570, 48
    %v577 = vadd.s32 %v570, 56
    %v578 = vadd.s32 %v570, 64
    %v579 = vadd.s32 %v570, 72
    %v580 = vadd.s32 %v570, 80
    %v581 = vadd.s32 %v570, 88
    %v582 = vadd.s32 %v570, 96
    %v583 = vadd.s32 %v570, 104
    %v584 = vadd.s32 %v570, 112
    %v585 = vadd.s32 %v570, 120
    %v586 = vstv %s554
    %v587 = vadd.s32 %v586, %v570
    %v588 = vadd.s32 %v586, %v571
    %v589 = vadd.s32 %v586, %v572
    %v590 = vadd.s32 %v586, %v573
    %v591 = vadd.s32 %v586, %v574
    %v592 = vadd.s32 %v586, %v575
    %v593 = vadd.s32 %v586, %v576
    %v594 = vadd.s32 %v586, %v577
    %v595 = vadd.s32 %v586, %v578
    %v596 = vadd.s32 %v586, %v579
    %v597 = vadd.s32 %v586, %v580
    %v598 = vadd.s32 %v586, %v581
    %v599 = vadd.s32 %v586, %v582
    %v600 = vadd.s32 %v586, %v583
    %v601 = vadd.s32 %v586, %v584
    %v602 = vadd.s32 %v586, %v585
    %v603 = vlaneseq
    %v604 = vand.u32 %v603, 127
    %v605 = vstv %s555
    %v606 = vadd.s32 %v605, %v604
    %vm607 = vcmp.ne.s32.totalorder %v587, %v606
    %vm608 = vcmp.ne.s32.totalorder %v588, %v606
    %vm609 = vcmp.ne.s32.totalorder %v589, %v606
    %vm610 = vcmp.ne.s32.totalorder %v590, %v606
    %vm611 = vcmp.ne.s32.totalorder %v591, %v606
    %vm612 = vcmp.ne.s32.totalorder %v592, %v606
    %vm613 = vcmp.ne.s32.totalorder %v593, %v606
    %vm614 = vcmp.ne.s32.totalorder %v594, %v606
    %vm615 = vcmp.ne.s32.totalorder %v595, %v606
    %vm616 = vcmp.ne.s32.totalorder %v596, %v606
    %vm617 = vcmp.ne.s32.totalorder %v597, %v606
    %vm618 = vcmp.ne.s32.totalorder %v598, %v606
    %vm619 = vcmp.ne.s32.totalorder %v599, %v606
    %vm620 = vcmp.ne.s32.totalorder %v600, %v606
    %vm621 = vcmp.ne.s32.totalorder %v601, %v606
    %vm622 = vcmp.ne.s32.totalorder %v602, %v606
    %vm623 = vcmp.lt.s32.totalorder %v587, 8
    %vm624 = vcmp.lt.s32.totalorder %v588, 8
    %vm625 = vcmp.lt.s32.totalorder %v589, 8
    %vm626 = vcmp.lt.s32.totalorder %v590, 8
    %vm627 = vcmp.lt.s32.totalorder %v591, 8
    %vm628 = vcmp.lt.s32.totalorder %v592, 8
    %vm629 = vcmp.lt.s32.totalorder %v593, 8
    %vm630 = vcmp.lt.s32.totalorder %v594, 8
    %vm631 = vcmp.lt.s32.totalorder %v595, 8
    %vm632 = vcmp.lt.s32.totalorder %v596, 8
    %vm633 = vcmp.lt.s32.totalorder %v597, 8
    %vm634 = vcmp.lt.s32.totalorder %v598, 8
    %vm635 = vcmp.lt.s32.totalorder %v599, 8
    %vm636 = vcmp.lt.s32.totalorder %v600, 8
    %vm637 = vcmp.lt.s32.totalorder %v601, 8
    %vm638 = vcmp.lt.s32.totalorder %v602, 8
    %vm639 = vmand %vm607, %vm623
    %vm640 = vmand %vm608, %vm624
    %vm641 = vmand %vm609, %vm625
    %vm642 = vmand %vm610, %vm626
    %vm643 = vmand %vm611, %vm627
    %vm644 = vmand %vm612, %vm628
    %vm645 = vmand %vm613, %vm629
    %vm646 = vmand %vm614, %vm630
    %vm647 = vmand %vm615, %vm631
    %vm648 = vmand %vm616, %vm632
    %vm649 = vmand %vm617, %vm633
    %vm650 = vmand %vm618, %vm634
    %vm651 = vmand %vm619, %vm635
    %vm652 = vmand %vm620, %vm636
    %vm653 = vmand %vm621, %vm637
    %vm654 = vmand %vm622, %vm638
    %vm655 = vcmp.lt.s32.totalorder %v606, 8
    %vm656 = vmand %vm639, %vm655
    %vm657 = vmand %vm640, %vm655
    %vm658 = vmand %vm641, %vm655
    %vm659 = vmand %vm642, %vm655
    %vm660 = vmand %vm643, %vm655
    %vm661 = vmand %vm644, %vm655
    %vm662 = vmand %vm645, %vm655
    %vm663 = vmand %vm646, %vm655
    %vm664 = vmand %vm647, %vm655
    %vm665 = vmand %vm648, %vm655
    %vm666 = vmand %vm649, %vm655
    %vm667 = vmand %vm650, %vm655
    %vm668 = vmand %vm651, %vm655
    %vm669 = vmand %vm652, %vm655
    %vm670 = vmand %vm653, %vm655
    %vm671 = vmand %vm654, %vm655
    %v672 = vld [vmem:[#allocation2] sm:$0xff]
    %v673 = vld [vmem:[#allocation2 + $0x8] sm:$0xff]
    %v674 = vld [vmem:[#allocation2 + $0x10] sm:$0xff]
    %v675 = vld [vmem:[#allocation2 + $0x18] sm:$0xff]
    %v676 = vld [vmem:[#allocation2 + $0x20] sm:$0xff]
    %v677 = vld [vmem:[#allocation2 + $0x28] sm:$0xff]
    %v678 = vld [vmem:[#allocation2 + $0x30] sm:$0xff]
    %v679 = vld [vmem:[#allocation2 + $0x38] sm:$0xff]
    %v680 = vld [vmem:[#allocation2 + $0x40] sm:$0xff]
    %v681 = vld [vmem:[#allocation2 + $0x48] sm:$0xff]
    %v682 = vld [vmem:[#allocation2 + $0x50] sm:$0xff]
    %v683 = vld [vmem:[#allocation2 + $0x58] sm:$0xff]
    %v684 = vld [vmem:[#allocation2 + $0x60] sm:$0xff]
    %v685 = vld [vmem:[#allocation2 + $0x68] sm:$0xff]
    %v686 = vld [vmem:[#allocation2 + $0x70] sm:$0xff]
    %v687 = vld [vmem:[#allocation2 + $0x78] sm:$0xff]
    %v688 = vsel %vm656, %v538, 0.0
    %v689 = vsel %vm657, %v539, 0.0
    %v690 = vsel %vm658, %v540, 0.0
    %v691 = vsel %vm659, %v541, 0.0
    %v692 = vsel %vm660, %v542, 0.0
    %v693 = vsel %vm661, %v543, 0.0
    %v694 = vsel %vm662, %v544, 0.0
    %v695 = vsel %vm663, %v545, 0.0
    %v696 = vsel %vm664, %v546, 0.0
    %v697 = vsel %vm665, %v547, 0.0
    %v698 = vsel %vm666, %v548, 0.0
    %v699 = vsel %vm667, %v549, 0.0
    %v700 = vsel %vm668, %v550, 0.0
    %v701 = vsel %vm669, %v551, 0.0
    %v702 = vsel %vm670, %v552, 0.0
    %v703 = vsel %vm671, %v553, 0.0
    %v704 = vadd.f32 %v672, %v688
    %v705 = vadd.f32 %v673, %v689
    %v706 = vadd.f32 %v674, %v690
    %v707 = vadd.f32 %v675, %v691
    %v708 = vadd.f32 %v676, %v692
    %v709 = vadd.f32 %v677, %v693
    %v710 = vadd.f32 %v678, %v694
    %v711 = vadd.f32 %v679, %v695
    %v712 = vadd.f32 %v680, %v696
    %v713 = vadd.f32 %v681, %v697
    %v714 = vadd.f32 %v682, %v698
    %v715 = vadd.f32 %v683, %v699
    %v716 = vadd.f32 %v684, %v700
    %v717 = vadd.f32 %v685, %v701
    %v718 = vadd.f32 %v686, %v702
    %v719 = vadd.f32 %v687, %v703
    %720 = vst [vmem:[#allocation2] sm:$0xff] %v704
    %721 = vst [vmem:[#allocation2 + $0x8] sm:$0xff] %v705
    %722 = vst [vmem:[#allocation2 + $0x10] sm:$0xff] %v706
    %723 = vst [vmem:[#allocation2 + $0x18] sm:$0xff] %v707
    %724 = vst [vmem:[#allocation2 + $0x20] sm:$0xff] %v708
    %725 = vst [vmem:[#allocation2 + $0x28] sm:$0xff] %v709
    %726 = vst [vmem:[#allocation2 + $0x30] sm:$0xff] %v710
    %727 = vst [vmem:[#allocation2 + $0x38] sm:$0xff] %v711
    %728 = vst [vmem:[#allocation2 + $0x40] sm:$0xff] %v712
    %729 = vst [vmem:[#allocation2 + $0x48] sm:$0xff] %v713
    %730 = vst [vmem:[#allocation2 + $0x50] sm:$0xff] %v714
    %731 = vst [vmem:[#allocation2 + $0x58] sm:$0xff] %v715
    %732 = vst [vmem:[#allocation2 + $0x60] sm:$0xff] %v716
    %733 = vst [vmem:[#allocation2 + $0x68] sm:$0xff] %v717
    %734 = vst [vmem:[#allocation2 + $0x70] sm:$0xff] %v718
    %735 = vst [vmem:[#allocation2 + $0x78] sm:$0xff] %v719
  $region33: #{tpu_custom_call.1} parent=0 // pred_fallthru
    _
  %p736 = pneg %p565
  // Predicated region
  $region34: #{tpu_custom_call.1} parent=0 // pred_check
    _
  $region35: #{tpu_custom_call.1} parent=0 // pred_check_branch
    %738 = sbr.rel (%p565) target = $region37
  $region36: #{tpu_custom_call.1} parent=0 // pred_region
    %v739 = vld [vmem:[#allocation2] sm:$0xff]
    %v740 = vld [vmem:[#allocation2 + $0x8] sm:$0xff]
    %v741 = vld [vmem:[#allocation2 + $0x10] sm:$0xff]
    %v742 = vld [vmem:[#allocation2 + $0x18] sm:$0xff]
    %v743 = vld [vmem:[#allocation2 + $0x20] sm:$0xff]
    %v744 = vld [vmem:[#allocation2 + $0x28] sm:$0xff]
    %v745 = vld [vmem:[#allocation2 + $0x30] sm:$0xff]
    %v746 = vld [vmem:[#allocation2 + $0x38] sm:$0xff]
    %v747 = vld [vmem:[#allocation2 + $0x40] sm:$0xff]
    %v748 = vld [vmem:[#allocation2 + $0x48] sm:$0xff]
    %v749 = vld [vmem:[#allocation2 + $0x50] sm:$0xff]
    %v750 = vld [vmem:[#allocation2 + $0x58] sm:$0xff]
    %v751 = vld [vmem:[#allocation2 + $0x60] sm:$0xff]
    %v752 = vld [vmem:[#allocation2 + $0x68] sm:$0xff]
    %v753 = vld [vmem:[#allocation2 + $0x70] sm:$0xff]
    %v754 = vld [vmem:[#allocation2 + $0x78] sm:$0xff]
    %v755 = vadd.f32 %v739, %v538
    %v756 = vadd.f32 %v740, %v539
    %v757 = vadd.f32 %v741, %v540
    %v758 = vadd.f32 %v742, %v541
    %v759 = vadd.f32 %v743, %v542
    %v760 = vadd.f32 %v744, %v543
    %v761 = vadd.f32 %v745, %v544
    %v762 = vadd.f32 %v746, %v545
    %v763 = vadd.f32 %v747, %v546
    %v764 = vadd.f32 %v748, %v547
    %v765 = vadd.f32 %v749, %v548
    %v766 = vadd.f32 %v750, %v549
    %v767 = vadd.f32 %v751, %v550
    %v768 = vadd.f32 %v752, %v551
    %v769 = vadd.f32 %v753, %v552
    %v770 = vadd.f32 %v754, %v553
    %771 = vst [vmem:[#allocation2] sm:$0xff] %v755
    %772 = vst [vmem:[#allocation2 + $0x8] sm:$0xff] %v756
    %773 = vst [vmem:[#allocation2 + $0x10] sm:$0xff] %v757
    %774 = vst [vmem:[#allocation2 + $0x18] sm:$0xff] %v758
    %775 = vst [vmem:[#allocation2 + $0x20] sm:$0xff] %v759
    %776 = vst [vmem:[#allocation2 + $0x28] sm:$0xff] %v760
    %777 = vst [vmem:[#allocation2 + $0x30] sm:$0xff] %v761
    %778 = vst [vmem:[#allocation2 + $0x38] sm:$0xff] %v762
    %779 = vst [vmem:[#allocation2 + $0x40] sm:$0xff] %v763
    %780 = vst [vmem:[#allocation2 + $0x48] sm:$0xff] %v764
    %781 = vst [vmem:[#allocation2 + $0x50] sm:$0xff] %v765
    %782 = vst [vmem:[#allocation2 + $0x58] sm:$0xff] %v766
    %783 = vst [vmem:[#allocation2 + $0x60] sm:$0xff] %v767
    %784 = vst [vmem:[#allocation2 + $0x68] sm:$0xff] %v768
    %785 = vst [vmem:[#allocation2 + $0x70] sm:$0xff] %v769
    %786 = vst [vmem:[#allocation2 + $0x78] sm:$0xff] %v770
  $region37: #{tpu_custom_call.1} parent=0 // pred_fallthru
    _
  // Predicated region
  $region38: #{tpu_custom_call.1} parent=0 // pred_check
    %p787 = pneg %p23
  $region39: #{tpu_custom_call.1} parent=0 // pred_check_branch
    %789 = sbr.rel (%p787) target = $region41
  $region40: #{tpu_custom_call.1} parent=0 // pred_region
    %v790 = vld [vmem:[#allocation2] sm:$0xff]
    %v791 = vld [vmem:[#allocation2 + $0x8] sm:$0xff]
    %v792 = vld [vmem:[#allocation2 + $0x10] sm:$0xff]
    %v793 = vld [vmem:[#allocation2 + $0x18] sm:$0xff]
    %v794 = vld [vmem:[#allocation2 + $0x20] sm:$0xff]
    %v795 = vld [vmem:[#allocation2 + $0x28] sm:$0xff]
    %v796 = vld [vmem:[#allocation2 + $0x30] sm:$0xff]
    %v797 = vld [vmem:[#allocation2 + $0x38] sm:$0xff]
    %v798 = vld [vmem:[#allocation2 + $0x40] sm:$0xff]
    %v799 = vld [vmem:[#allocation2 + $0x48] sm:$0xff]
    %v800 = vld [vmem:[#allocation2 + $0x50] sm:$0xff]
    %v801 = vld [vmem:[#allocation2 + $0x58] sm:$0xff]
    %v802 = vld [vmem:[#allocation2 + $0x60] sm:$0xff]
    %v803 = vld [vmem:[#allocation2 + $0x68] sm:$0xff]
    %v804 = vld [vmem:[#allocation2 + $0x70] sm:$0xff]
    %v805 = vld [vmem:[#allocation2 + $0x78] sm:$0xff]
    %806 = vadd.xlane.f32.xlu0 %v790
    %v807 = vpop.xlane.xlu0 %806
    %808 = vadd.xlane.f32.xlu0 %v791
    %v809 = vpop.xlane.xlu0 %808
    %810 = vadd.xlane.f32.xlu0 %v792
    %v811 = vpop.xlane.xlu0 %810
    %812 = vadd.xlane.f32.xlu0 %v793
    %v813 = vpop.xlane.xlu0 %812
    %814 = vadd.xlane.f32.xlu0 %v794
    %v815 = vpop.xlane.xlu0 %814
    %816 = vadd.xlane.f32.xlu0 %v795
    %v817 = vpop.xlane.xlu0 %816
    %818 = vadd.xlane.f32.xlu0 %v796
    %v819 = vpop.xlane.xlu0 %818
    %820 = vadd.xlane.f32.xlu0 %v797
    %v821 = vpop.xlane.xlu0 %820
    %822 = vadd.xlane.f32.xlu0 %v798
    %v823 = vpop.xlane.xlu0 %822
    %824 = vadd.xlane.f32.xlu0 %v799
    %v825 = vpop.xlane.xlu0 %824
    %826 = vadd.xlane.f32.xlu0 %v800
    %v827 = vpop.xlane.xlu0 %826
    %828 = vadd.xlane.f32.xlu0 %v801
    %v829 = vpop.xlane.xlu0 %828
    %830 = vadd.xlane.f32.xlu0 %v802
    %v831 = vpop.xlane.xlu0 %830
    %832 = vadd.xlane.f32.xlu0 %v803
    %v833 = vpop.xlane.xlu0 %832
    %834 = vadd.xlane.f32.xlu0 %v804
    %v835 = vpop.xlane.xlu0 %834
    %836 = vadd.xlane.f32.xlu0 %v805
    %v837 = vpop.xlane.xlu0 %836
    %vm838 = vcmask 7168
    %839 = vst.msk [vmem:[%s6] sm:$0xff] %vm838, %v807
    %840 = vst.msk [vmem:[%s6 + $0x8] sm:$0xff] %vm838, %v809
    %841 = vst.msk [vmem:[%s6 + $0x10] sm:$0xff] %vm838, %v811
    %842 = vst.msk [vmem:[%s6 + $0x18] sm:$0xff] %vm838, %v813
    %843 = vst.msk [vmem:[%s6 + $0x20] sm:$0xff] %vm838, %v815
    %844 = vst.msk [vmem:[%s6 + $0x28] sm:$0xff] %vm838, %v817
    %845 = vst.msk [vmem:[%s6 + $0x30] sm:$0xff] %vm838, %v819
    %846 = vst.msk [vmem:[%s6 + $0x38] sm:$0xff] %vm838, %v821
    %847 = vst.msk [vmem:[%s6 + $0x40] sm:$0xff] %vm838, %v823
    %848 = vst.msk [vmem:[%s6 + $0x48] sm:$0xff] %vm838, %v825
    %849 = vst.msk [vmem:[%s6 + $0x50] sm:$0xff] %vm838, %v827
    %850 = vst.msk [vmem:[%s6 + $0x58] sm:$0xff] %vm838, %v829
    %851 = vst.msk [vmem:[%s6 + $0x60] sm:$0xff] %vm838, %v831
    %852 = vst.msk [vmem:[%s6 + $0x68] sm:$0xff] %vm838, %v833
    %853 = vst.msk [vmem:[%s6 + $0x70] sm:$0xff] %vm838, %v835
    %854 = vst.msk [vmem:[%s6 + $0x78] sm:$0xff] %vm838, %v837
  $region41: #{tpu_custom_call.1} parent=0 // pred_fallthru
    _
  // Predicated region
  $region42: #{tpu_custom_call.1} parent=0 // pred_check
    _
  $region43: #{tpu_custom_call.1} parent=0 // pred_check_branch
    %856 = sbr.rel (0) target = $region45
  $region44: #{tpu_custom_call.1} parent=0 // pred_region
    _
  $region45: #{tpu_custom_call.1} parent=0 // pred_fallthru
    _
  // Predicated region
  $region46: #{tpu_custom_call.1} parent=0 // pred_check
    _
  $region47: #{tpu_custom_call.1} parent=0 // pred_check_branch
    %858 = sbr.rel (0) target = $region49
  $region48: #{tpu_custom_call.1} parent=0 // pred_region
    _
  $region49: #{tpu_custom_call.1} parent=0 // pred_fallthru
    _

</llo_original>
